<compile_context>
chip_gen: v5e
topology: v5e:2x2
jax: 0.10.0
libtpu: 0.0.40
codegen_flags: <defaults>
</compile_context>

<pallas_src>
import math

import jax
import jax.numpy as jnp
from jax.experimental import pallas as pl
from jax.experimental.pallas import tpu as pltpu


def mha_kernel(q_ref, k_ref, v_ref,
               wq_ref, bq_ref, wk_ref, bk_ref, wv_ref, bv_ref,
               wo_ref, bo_ref,
               x_out_ref, attn_out_ref,
               acc_ref):
    h = pl.program_id(1)
    n_heads = pl.num_programs(1)
    head_dim = wq_ref.shape[2]
    inv_scale = jnp.float32(1.0 / math.sqrt(head_dim))

    q = q_ref[0]          # (S, H) bf16
    k = k_ref[0]
    v = v_ref[0]

    # Per-head projections: bf16 operands, f32 accumulation, f32 bias add.
    Qh = jnp.dot(q, wq_ref[0], preferred_element_type=jnp.float32) + bq_ref[0]
    Kh = jnp.dot(k, wk_ref[0], preferred_element_type=jnp.float32) + bk_ref[0]
    Vh = jnp.dot(v, wv_ref[0], preferred_element_type=jnp.float32) + bv_ref[0]

    # Fold 1/sqrt(head_dim) into Q (once, on (S, head_dim)) instead of
    # dividing the (S, S) energy tensor.
    Qh_bf = (Qh * inv_scale).astype(jnp.bfloat16)
    Kh_bf = Kh.astype(jnp.bfloat16)

    # energy = Q K^T : contract head_dim directly (no in-kernel transpose).
    energy = jax.lax.dot_general(
        Qh_bf, Kh_bf, (((1,), (1,)), ((), ())),
        preferred_element_type=jnp.float32)            # (S, S) f32

    # Softmax over keys in f32; reciprocal goes to the EUP slot.
    m = jnp.max(energy, axis=-1, keepdims=True)
    e = jnp.exp(energy - m)
    attn = e * pl.reciprocal(jnp.sum(e, axis=-1, keepdims=True), approx=True)

    # ctx_h = attn @ V_h ; head contribution to output = ctx_h @ Wo[h]
    ctx = jnp.dot(attn.astype(jnp.bfloat16), Vh.astype(jnp.bfloat16),
                  preferred_element_type=jnp.float32)  # (S, head_dim)
    contrib = jnp.dot(ctx.astype(jnp.bfloat16), wo_ref[0],
                      preferred_element_type=jnp.float32)  # (S, H)

    # Accumulate across the head grid axis in an f32 VMEM scratch; bias is
    # folded in at head 0.  Store the output block once, at the last head.
    @pl.when(h == 0)
    def _init():
        acc_ref[...] = contrib + bo_ref[...]

    @pl.when(h != 0)
    def _acc():
        acc_ref[...] = acc_ref[...] + contrib

    @pl.when(h == n_heads - 1)
    def _store():
        x_out_ref[0] = acc_ref[...].astype(x_out_ref.dtype)

    attn_out_ref[0, 0] = attn.astype(attn_out_ref.dtype)


def multi_head_attention(query, key, value, params, *, n_heads):
    """query/key/value: (B, S, H) float32.  Returns (x, attention) in f32."""
    B, S, H = query.shape
    head_dim = H // n_heads

    # PyTorch Linear: y = x @ W^T + b, with W stored (out, in).
    # Pre-lay-out weights per head so the head grid axis indexes a leading
    # block dim (no dynamic lane slicing, no in-kernel transposes).
    def split_heads_w(w):                                  # (H_out, H_in)
        wt = w.T.astype(jnp.bfloat16)                      # (H_in, H_out)
        return wt.reshape(H, n_heads, head_dim).transpose(1, 0, 2)  # (nh, H, hd)

    def split_heads_b(b):
        return b.reshape(n_heads, 1, head_dim).astype(jnp.float32)  # (nh, 1, hd)

    wq_h = split_heads_w(params['wq']); bq_h = split_heads_b(params['bq'])
    wk_h = split_heads_w(params['wk']); bk_h = split_heads_b(params['bk'])
    wv_h = split_heads_w(params['wv']); bv_h = split_heads_b(params['bv'])

    # fc_o: out = ctx @ Wo^T + bo; per head we need rows h*hd:(h+1)*hd of Wo^T.
    wo_h = params['wo'].T.astype(jnp.bfloat16).reshape(n_heads, head_dim, H)
    bo = params['bo'].reshape(1, H).astype(jnp.float32)

    # bf16 activations halve activation DMA; all elementwise math stays f32.
    q_bf = query.astype(jnp.bfloat16)
    k_bf = key.astype(jnp.bfloat16)
    v_bf = value.astype(jnp.bfloat16)

    qkv_spec = pl.BlockSpec((1, S, H), lambda b, h: (b, 0, 0))
    w_spec = pl.BlockSpec((1, H, head_dim), lambda b, h: (h, 0, 0))
    b_spec = pl.BlockSpec((1, 1, head_dim), lambda b, h: (h, 0, 0))
    wo_spec = pl.BlockSpec((1, head_dim, H), lambda b, h: (h, 0, 0))
    bo_spec = pl.BlockSpec((1, H), lambda b, h: (0, 0))

    x_out, attn_out = pl.pallas_call(
        mha_kernel,
        out_shape=(
            jax.ShapeDtypeStruct((B, S, H), jnp.float32),
            jax.ShapeDtypeStruct((B, n_heads, S, S), jnp.float32),
        ),
        grid_spec=pltpu.PrefetchScalarGridSpec(
            num_scalar_prefetch=0,
            grid=(B, n_heads),
            in_specs=[
                qkv_spec, qkv_spec, qkv_spec,          # query, key, value
                w_spec, b_spec,                        # fc_q (per-head)
                w_spec, b_spec,                        # fc_k (per-head)
                w_spec, b_spec,                        # fc_v (per-head)
                wo_spec, bo_spec,                      # fc_o (per-head rows)
            ],
            out_specs=[
                pl.BlockSpec((1, S, H), lambda b, h: (b, 0, 0)),        # accumulated over h
                pl.BlockSpec((1, 1, S, S), lambda b, h: (b, h, 0, 0)),  # per (b, h) tile
            ],
            scratch_shapes=[pltpu.VMEM((S, H), jnp.float32)],
        ),
        compiler_params=pltpu.CompilerParams(
            dimension_semantics=("parallel", "arbitrary"),
        ),
    )(q_bf, k_bf, v_bf, wq_h, bq_h, wk_h, bk_h, wv_h, bv_h, wo_h, bo)

    return x_out, attn_out


def reference_mha(query, key, value, params, *, n_heads):
    """Pure-JAX f32 reference mirroring the PyTorch forward (mask=None, eval)."""
    B, S, H = query.shape
    head_dim = H // n_heads
    scale = math.sqrt(head_dim)

    def lin(x, w, b):
        return x @ w.T + b

    Q = lin(query, params['wq'], params['bq'])
    K = lin(key, params['wk'], params['bk'])
    V = lin(value, params['wv'], params['bv'])

    Q = Q.reshape(B, S, n_heads, head_dim).transpose(0, 2, 1, 3)
    K = K.reshape(B, S, n_heads, head_dim).transpose(0, 2, 1, 3)
    V = V.reshape(B, S, n_heads, head_dim).transpose(0, 2, 1, 3)

    energy = jnp.einsum('bhqd,bhkd->bhqk', Q, K) / scale
    attention = jax.nn.softmax(energy, axis=-1)
    x = jnp.einsum('bhqk,bhkd->bhqd', attention, V)
    x = x.transpose(0, 2, 1, 3).reshape(B, S, H)
    x = lin(x, params['wo'], params['bo'])
    return x, attention


def init_params(key, hid_dim):
    """Deterministic init mimicking nn.Linear default (uniform +/- 1/sqrt(in))."""
    bound = 1.0 / math.sqrt(hid_dim)
    keys = jax.random.split(key, 8)
    u = lambda k, shape: jax.random.uniform(k, shape, jnp.float32, -bound, bound)
    return {
        'wq': u(keys[0], (hid_dim, hid_dim)), 'bq': u(keys[1], (hid_dim,)),
        'wk': u(keys[2], (hid_dim, hid_dim)), 'bk': u(keys[3], (hid_dim,)),
        'wv': u(keys[4], (hid_dim, hid_dim)), 'bv': u(keys[5], (hid_dim,)),
        'wo': u(keys[6], (hid_dim, hid_dim)), 'bo': u(keys[7], (hid_dim,)),
    }


if __name__ == "__main__":
    B, S, H, N_HEADS = 2, 8, 32, 4

    root = jax.random.PRNGKey(0)
    k_params, k_q, k_k, k_v = jax.random.split(root, 4)

    params = init_params(k_params, H)
    query = jax.random.normal(k_q, (B, S, H), jnp.float32)
    key_in = jax.random.normal(k_k, (B, S, H), jnp.float32)
    value = jax.random.normal(k_v, (B, S, H), jnp.float32)

    x, attn = multi_head_attention(query, key_in, value, params, n_heads=N_HEADS)
    x = jax.block_until_ready(x)
    attn = jax.block_until_ready(attn)

    x_ref, attn_ref = reference_mha(query, key_in, value, params, n_heads=N_HEADS)

    assert x.shape == (B, S, H)
    assert attn.shape == (B, N_HEADS, S, S)
    # bf16 matmul operands => looser tolerance than the pure-f32 version.
    assert jnp.allclose(x, x_ref, atol=5e-2, rtol=5e-2), \
        f"x mismatch, max abs diff {jnp.max(jnp.abs(x - x_ref))}"
    assert jnp.allclose(attn, attn_ref, atol=2e-2, rtol=2e-2), \
        f"attn mismatch, max abs diff {jnp.max(jnp.abs(attn - attn_ref))}"

    print("KERNEL_OK")
</pallas_src>

<mosaic_0001>
module attributes {stable_mosaic.version = 11 : i64} {
  func.func @mha_kernel(%arg0: i32, %arg1: i32, %arg2: memref<1x8x32xbf16, #tpu.memory_space<vmem>>, %arg3: memref<1x8x32xbf16, #tpu.memory_space<vmem>>, %arg4: memref<1x8x32xbf16, #tpu.memory_space<vmem>>, %arg5: memref<1x32x8xbf16, #tpu.memory_space<vmem>>, %arg6: memref<1x1x8xf32, #tpu.memory_space<vmem>>, %arg7: memref<1x32x8xbf16, #tpu.memory_space<vmem>>, %arg8: memref<1x1x8xf32, #tpu.memory_space<vmem>>, %arg9: memref<1x32x8xbf16, #tpu.memory_space<vmem>>, %arg10: memref<1x1x8xf32, #tpu.memory_space<vmem>>, %arg11: memref<1x8x32xbf16, #tpu.memory_space<vmem>>, %arg12: memref<1x32xf32, #tpu.memory_space<vmem>>, %arg13: memref<1x8x32xf32, #tpu.memory_space<vmem>>, %arg14: memref<1x1x8x8xf32, #tpu.memory_space<vmem>>, %arg15: memref<8x32xf32, #tpu.memory_space<vmem>>) attributes {dimension_semantics = [#tpu.dimension_semantics<parallel>, #tpu.dimension_semantics<arbitrary>], iteration_bounds = array<i64: 2, 4>, scalar_prefetch = 0 : i64, scratch_operands = 1 : i64, tpu.core_type = #tpu.core_type<tc>, window_params = [{transform_indices = @transform_0, window_bounds = array<i64: 1, 8, 32>}, {transform_indices = @transform_1, window_bounds = array<i64: 1, 8, 32>}, {transform_indices = @transform_2, window_bounds = array<i64: 1, 8, 32>}, {transform_indices = @transform_3, window_bounds = array<i64: 1, 32, 8>}, {transform_indices = @transform_4, window_bounds = array<i64: 1, 1, 8>}, {transform_indices = @transform_5, window_bounds = array<i64: 1, 32, 8>}, {transform_indices = @transform_6, window_bounds = array<i64: 1, 1, 8>}, {transform_indices = @transform_7, window_bounds = array<i64: 1, 32, 8>}, {transform_indices = @transform_8, window_bounds = array<i64: 1, 1, 8>}, {transform_indices = @transform_9, window_bounds = array<i64: 1, 8, 32>}, {pipeline_mode = #tpu.pipeline_mode<synchronous>, transform_indices = @transform_10, window_bounds = array<i64: 1, 32>}, {transform_indices = @transform_11, window_bounds = array<i64: 1, 8, 32>}, {transform_indices = @transform_12, window_bounds = array<i64: 1, 1, 8, 8>}]} {
    %c0 = arith.constant 0 : index
    %c0_0 = arith.constant 0 : index
    %c0_1 = arith.constant 0 : index
    %0 = vector.load %arg2[%c0, %c0_0, %c0_1] : memref<1x8x32xbf16, #tpu.memory_space<vmem>>, vector<1x8x32xbf16>
    %1 = vector.shape_cast %0 : vector<1x8x32xbf16> to vector<8x32xbf16>
    %c0_2 = arith.constant 0 : index
    %c0_3 = arith.constant 0 : index
    %c0_4 = arith.constant 0 : index
    %2 = vector.load %arg3[%c0_2, %c0_3, %c0_4] : memref<1x8x32xbf16, #tpu.memory_space<vmem>>, vector<1x8x32xbf16>
    %3 = vector.shape_cast %2 : vector<1x8x32xbf16> to vector<8x32xbf16>
    %c0_5 = arith.constant 0 : index
    %c0_6 = arith.constant 0 : index
    %c0_7 = arith.constant 0 : index
    %4 = vector.load %arg4[%c0_5, %c0_6, %c0_7] : memref<1x8x32xbf16, #tpu.memory_space<vmem>>, vector<1x8x32xbf16>
    %5 = vector.shape_cast %4 : vector<1x8x32xbf16> to vector<8x32xbf16>
    %c0_8 = arith.constant 0 : index
    %c0_9 = arith.constant 0 : index
    %c0_10 = arith.constant 0 : index
    %6 = vector.load %arg5[%c0_8, %c0_9, %c0_10] : memref<1x32x8xbf16, #tpu.memory_space<vmem>>, vector<1x32x8xbf16>
    %7 = vector.shape_cast %6 : vector<1x32x8xbf16> to vector<32x8xbf16>
    %cst = arith.constant dense<0.000000e+00> : vector<8x8xf32>
    %8 = tpu.matmul %1, %7, %cst {dimension_numbers = #tpu.dot_dimension_numbers<[1], [0], [0], [1], [0, 0, 1, 1], [], []>} : vector<8x32xbf16>, vector<32x8xbf16>, vector<8x8xf32> -> vector<8x8xf32>
    %c0_11 = arith.constant 0 : index
    %c0_12 = arith.constant 0 : index
    %c0_13 = arith.constant 0 : index
    %9 = vector.load %arg6[%c0_11, %c0_12, %c0_13] : memref<1x1x8xf32, #tpu.memory_space<vmem>>, vector<1x1x8xf32>
    %10 = vector.shape_cast %9 : vector<1x1x8xf32> to vector<1x8xf32>
    %11 = vector.broadcast %10 : vector<1x8xf32> to vector<8x8xf32>
    %12 = arith.addf %8, %11 : vector<8x8xf32>
    %c0_14 = arith.constant 0 : index
    %c0_15 = arith.constant 0 : index
    %c0_16 = arith.constant 0 : index
    %13 = vector.load %arg7[%c0_14, %c0_15, %c0_16] : memref<1x32x8xbf16, #tpu.memory_space<vmem>>, vector<1x32x8xbf16>
    %14 = vector.shape_cast %13 : vector<1x32x8xbf16> to vector<32x8xbf16>
    %cst_17 = arith.constant dense<0.000000e+00> : vector<8x8xf32>
    %15 = tpu.matmul %3, %14, %cst_17 {dimension_numbers = #tpu.dot_dimension_numbers<[1], [0], [0], [1], [0, 0, 1, 1], [], []>} : vector<8x32xbf16>, vector<32x8xbf16>, vector<8x8xf32> -> vector<8x8xf32>
    %c0_18 = arith.constant 0 : index
    %c0_19 = arith.constant 0 : index
    %c0_20 = arith.constant 0 : index
    %16 = vector.load %arg8[%c0_18, %c0_19, %c0_20] : memref<1x1x8xf32, #tpu.memory_space<vmem>>, vector<1x1x8xf32>
    %17 = vector.shape_cast %16 : vector<1x1x8xf32> to vector<1x8xf32>
    %18 = vector.broadcast %17 : vector<1x8xf32> to vector<8x8xf32>
    %19 = arith.addf %15, %18 : vector<8x8xf32>
    %c0_21 = arith.constant 0 : index
    %c0_22 = arith.constant 0 : index
    %c0_23 = arith.constant 0 : index
    %20 = vector.load %arg9[%c0_21, %c0_22, %c0_23] : memref<1x32x8xbf16, #tpu.memory_space<vmem>>, vector<1x32x8xbf16>
    %21 = vector.shape_cast %20 : vector<1x32x8xbf16> to vector<32x8xbf16>
    %cst_24 = arith.constant dense<0.000000e+00> : vector<8x8xf32>
    %22 = tpu.matmul %5, %21, %cst_24 {dimension_numbers = #tpu.dot_dimension_numbers<[1], [0], [0], [1], [0, 0, 1, 1], [], []>} : vector<8x32xbf16>, vector<32x8xbf16>, vector<8x8xf32> -> vector<8x8xf32>
    %c0_25 = arith.constant 0 : index
    %c0_26 = arith.constant 0 : index
    %c0_27 = arith.constant 0 : index
    %23 = vector.load %arg10[%c0_25, %c0_26, %c0_27] : memref<1x1x8xf32, #tpu.memory_space<vmem>>, vector<1x1x8xf32>
    %24 = vector.shape_cast %23 : vector<1x1x8xf32> to vector<1x8xf32>
    %25 = vector.broadcast %24 : vector<1x8xf32> to vector<8x8xf32>
    %26 = arith.addf %22, %25 : vector<8x8xf32>
    %cst_28 = arith.constant 0.353553385 : f32
    %27 = vector.broadcast %cst_28 : f32 to vector<8x8xf32>
    %28 = arith.mulf %12, %27 : vector<8x8xf32>
    %29 = arith.truncf %28 : vector<8x8xf32> to vector<8x8xbf16>
    %30 = arith.truncf %19 : vector<8x8xf32> to vector<8x8xbf16>
    %cst_29 = arith.constant dense<0.000000e+00> : vector<8x8xf32>
    %31 = tpu.matmul %29, %30, %cst_29 {dimension_numbers = #tpu.dot_dimension_numbers<[1], [1], [0], [0], [0, 0, 1, 0], [], []>} : vector<8x8xbf16>, vector<8x8xbf16>, vector<8x8xf32> -> vector<8x8xf32>
    %cst_30 = arith.constant dense<0xFF800000> : vector<8xf32>
    %32 = vector.multi_reduction <maximumf>, %31, %cst_30 [1] : vector<8x8xf32> to vector<8xf32>
    %33 = vector.shape_cast %32 : vector<8xf32> to vector<8x1xf32>
    %34 = vector.broadcast %33 : vector<8x1xf32> to vector<8x8xf32>
    %35 = arith.subf %31, %34 : vector<8x8xf32>
    %36 = math.exp %35 : vector<8x8xf32>
    %cst_31 = arith.constant dense<0.000000e+00> : vector<8xf32>
    %37 = vector.multi_reduction <add>, %36, %cst_31 [1] : vector<8x8xf32> to vector<8xf32>
    %38 = vector.shape_cast %37 : vector<8xf32> to vector<8x1xf32>
    %39 = tpu.reciprocal %38 {approx = true} : vector<8x1xf32> -> vector<8x1xf32>
    %40 = vector.broadcast %39 : vector<8x1xf32> to vector<8x8xf32>
    %41 = arith.mulf %36, %40 : vector<8x8xf32>
    %42 = arith.truncf %41 : vector<8x8xf32> to vector<8x8xbf16>
    %43 = arith.truncf %26 : vector<8x8xf32> to vector<8x8xbf16>
    %cst_32 = arith.constant dense<0.000000e+00> : vector<8x8xf32>
    %44 = tpu.matmul %42, %43, %cst_32 {dimension_numbers = #tpu.dot_dimension_numbers<[1], [0], [0], [1], [0, 0, 1, 1], [], []>} : vector<8x8xbf16>, vector<8x8xbf16>, vector<8x8xf32> -> vector<8x8xf32>
    %45 = arith.truncf %44 : vector<8x8xf32> to vector<8x8xbf16>
    %c0_33 = arith.constant 0 : index
    %c0_34 = arith.constant 0 : index
    %c0_35 = arith.constant 0 : index
    %46 = vector.load %arg11[%c0_33, %c0_34, %c0_35] : memref<1x8x32xbf16, #tpu.memory_space<vmem>>, vector<1x8x32xbf16>
    %47 = vector.shape_cast %46 : vector<1x8x32xbf16> to vector<8x32xbf16>
    %cst_36 = arith.constant dense<0.000000e+00> : vector<8x32xf32>
    %48 = tpu.matmul %45, %47, %cst_36 {dimension_numbers = #tpu.dot_dimension_numbers<[1], [0], [0], [1], [0, 0, 1, 1], [], []>} : vector<8x8xbf16>, vector<8x32xbf16>, vector<8x32xf32> -> vector<8x32xf32>
    %c0_i32 = arith.constant 0 : i32
    %49 = arith.cmpi eq, %arg1, %c0_i32 : i32
    %50 = arith.extui %49 : i1 to i32
    %c0_i32_37 = arith.constant 0 : i32
    %51 = arith.cmpi ne, %50, %c0_i32_37 : i32
    scf.if %51 {
      %c0_45 = arith.constant 0 : index
      %c0_46 = arith.constant 0 : index
      %61 = vector.load %arg12[%c0_45, %c0_46] : memref<1x32xf32, #tpu.memory_space<vmem>>, vector<1x32xf32>
      %62 = vector.broadcast %61 : vector<1x32xf32> to vector<8x32xf32>
      %63 = arith.addf %48, %62 : vector<8x32xf32>
      %c0_47 = arith.constant 0 : index
      %c0_48 = arith.constant 0 : index
      %64 = vector.load %arg15[%c0_47, %c0_48] : memref<8x32xf32, #tpu.memory_space<vmem>>, vector<8x32xf32>
      tpu.vector_store %arg15[%c0_47, %c0_48], %63 {strides = array<i32>} : memref<8x32xf32, #tpu.memory_space<vmem>>, vector<8x32xf32>,
    } else {
    }
    %c0_i32_38 = arith.constant 0 : i32
    %52 = arith.cmpi ne, %arg1, %c0_i32_38 : i32
    %53 = arith.extui %52 : i1 to i32
    %c0_i32_39 = arith.constant 0 : i32
    %54 = arith.cmpi ne, %53, %c0_i32_39 : i32
    scf.if %54 {
      %c0_45 = arith.constant 0 : index
      %c0_46 = arith.constant 0 : index
      %61 = vector.load %arg15[%c0_45, %c0_46] : memref<8x32xf32, #tpu.memory_space<vmem>>, vector<8x32xf32>
      %62 = arith.addf %61, %48 : vector<8x32xf32>
      %c0_47 = arith.constant 0 : index
      %c0_48 = arith.constant 0 : index
      %63 = vector.load %arg15[%c0_47, %c0_48] : memref<8x32xf32, #tpu.memory_space<vmem>>, vector<8x32xf32>
      tpu.vector_store %arg15[%c0_47, %c0_48], %62 {strides = array<i32>} : memref<8x32xf32, #tpu.memory_space<vmem>>, vector<8x32xf32>,
    } else {
    }
    %c3_i32 = arith.constant 3 : i32
    %55 = arith.cmpi eq, %arg1, %c3_i32 : i32
    %56 = arith.extui %55 : i1 to i32
    %c0_i32_40 = arith.constant 0 : i32
    %57 = arith.cmpi ne, %56, %c0_i32_40 : i32
    scf.if %57 {
      %c0_45 = arith.constant 0 : index
      %c0_46 = arith.constant 0 : index
      %61 = vector.load %arg15[%c0_45, %c0_46] : memref<8x32xf32, #tpu.memory_space<vmem>>, vector<8x32xf32>
      %c0_47 = arith.constant 0 : index
      %c0_48 = arith.constant 0 : index
      %c0_49 = arith.constant 0 : index
      %62 = vector.load %arg13[%c0_47, %c0_48, %c0_49] : memref<1x8x32xf32, #tpu.memory_space<vmem>>, vector<1x8x32xf32>
      %63 = vector.shape_cast %62 : vector<1x8x32xf32> to vector<8x32xf32>
      %64 = vector.shape_cast %61 : vector<8x32xf32> to vector<1x8x32xf32>
      tpu.vector_store %arg13[%c0_47, %c0_48, %c0_49], %64 {strides = array<i32>} : memref<1x8x32xf32, #tpu.memory_space<vmem>>, vector<1x8x32xf32>,
    } else {
    }
    %c0_41 = arith.constant 0 : index
    %c0_42 = arith.constant 0 : index
    %c0_43 = arith.constant 0 : index
    %c0_44 = arith.constant 0 : index
    %58 = vector.load %arg14[%c0_41, %c0_42, %c0_43, %c0_44] : memref<1x1x8x8xf32, #tpu.memory_space<vmem>>, vector<1x1x8x8xf32>
    %59 = vector.shape_cast %58 : vector<1x1x8x8xf32> to vector<8x8xf32>
    %60 = vector.shape_cast %41 : vector<8x8xf32> to vector<1x1x8x8xf32>
    tpu.vector_store %arg14[%c0_41, %c0_42, %c0_43, %c0_44], %60 {strides = array<i32>} : memref<1x1x8x8xf32, #tpu.memory_space<vmem>>, vector<1x1x8x8xf32>,
    return
  }
  func.func @transform_0(%arg0: i32, %arg1: i32) -> (i32, i32, i32) {
    %c0_i32 = arith.constant 0 : i32
    %c0_i32_0 = arith.constant 0 : i32
    %c0_i32_1 = arith.constant 0 : i32
    return %arg0, %c0_i32, %c0_i32_0 : i32, i32, i32
  }
  func.func @transform_1(%arg0: i32, %arg1: i32) -> (i32, i32, i32) {
    %c0_i32 = arith.constant 0 : i32
    %c0_i32_0 = arith.constant 0 : i32
    %c0_i32_1 = arith.constant 0 : i32
    return %arg0, %c0_i32, %c0_i32_0 : i32, i32, i32
  }
  func.func @transform_2(%arg0: i32, %arg1: i32) -> (i32, i32, i32) {
    %c0_i32 = arith.constant 0 : i32
    %c0_i32_0 = arith.constant 0 : i32
    %c0_i32_1 = arith.constant 0 : i32
    return %arg0, %c0_i32, %c0_i32_0 : i32, i32, i32
  }
  func.func @transform_3(%arg0: i32, %arg1: i32) -> (i32, i32, i32) {
    %c0_i32 = arith.constant 0 : i32
    %c0_i32_0 = arith.constant 0 : i32
    %c0_i32_1 = arith.constant 0 : i32
    return %arg1, %c0_i32, %c0_i32_0 : i32, i32, i32
  }
  func.func @transform_4(%arg0: i32, %arg1: i32) -> (i32, i32, i32) {
    %c0_i32 = arith.constant 0 : i32
    %c0_i32_0 = arith.constant 0 : i32
    %c0_i32_1 = arith.constant 0 : i32
    return %arg1, %c0_i32, %c0_i32_0 : i32, i32, i32
  }
  func.func @transform_5(%arg0: i32, %arg1: i32) -> (i32, i32, i32) {
    %c0_i32 = arith.constant 0 : i32
    %c0_i32_0 = arith.constant 0 : i32
    %c0_i32_1 = arith.constant 0 : i32
    return %arg1, %c0_i32, %c0_i32_0 : i32, i32, i32
  }
  func.func @transform_6(%arg0: i32, %arg1: i32) -> (i32, i32, i32) {
    %c0_i32 = arith.constant 0 : i32
    %c0_i32_0 = arith.constant 0 : i32
    %c0_i32_1 = arith.constant 0 : i32
    return %arg1, %c0_i32, %c0_i32_0 : i32, i32, i32
  }
  func.func @transform_7(%arg0: i32, %arg1: i32) -> (i32, i32, i32) {
    %c0_i32 = arith.constant 0 : i32
    %c0_i32_0 = arith.constant 0 : i32
    %c0_i32_1 = arith.constant 0 : i32
    return %arg1, %c0_i32, %c0_i32_0 : i32, i32, i32
  }
  func.func @transform_8(%arg0: i32, %arg1: i32) -> (i32, i32, i32) {
    %c0_i32 = arith.constant 0 : i32
    %c0_i32_0 = arith.constant 0 : i32
    %c0_i32_1 = arith.constant 0 : i32
    return %arg1, %c0_i32, %c0_i32_0 : i32, i32, i32
  }
  func.func @transform_9(%arg0: i32, %arg1: i32) -> (i32, i32, i32) {
    %c0_i32 = arith.constant 0 : i32
    %c0_i32_0 = arith.constant 0 : i32
    %c0_i32_1 = arith.constant 0 : i32
    return %arg1, %c0_i32, %c0_i32_0 : i32, i32, i32
  }
  func.func @transform_10(%arg0: i32, %arg1: i32) -> (i32, i32) {
    %c0_i32 = arith.constant 0 : i32
    %c0_i32_0 = arith.constant 0 : i32
    %c0_i32_1 = arith.constant 0 : i32
    return %c0_i32, %c0_i32_0 : i32, i32
  }
  func.func @transform_11(%arg0: i32, %arg1: i32) -> (i32, i32, i32) {
    %c0_i32 = arith.constant 0 : i32
    %c0_i32_0 = arith.constant 0 : i32
    %c0_i32_1 = arith.constant 0 : i32
    return %arg0, %c0_i32, %c0_i32_0 : i32, i32, i32
  }
  func.func @transform_12(%arg0: i32, %arg1: i32) -> (i32, i32, i32, i32) {
    %c0_i32 = arith.constant 0 : i32
    %c0_i32_0 = arith.constant 0 : i32
    %c0_i32_1 = arith.constant 0 : i32
    return %arg0, %arg1, %c0_i32, %c0_i32_0 : i32, i32, i32, i32
  }
}

</mosaic_0001>

<llo_original>
// kernel: tpu_custom_call.1
$region0: #{tpu_custom_call.1}
  #allocation0 [shape = 'u32[]', space=smem, size = 0x4, offset = 0x4, fixed_abs, tag = 'smem constant byte address 0x4 - core index']
  #allocation1 [shape = 'u32[72,128]{1,0:T(1,128)}', space=vmem, size = 0x9000, scoped, tag = 'internal scratch']
  #allocation2 [shape = 'f32[8,32]{1,0:T(8,128)}', space=vmem, size = 0x1000, scoped, tag = 'scratch operand']
  %s0 = inlined_call_operand.vmem [shape: bf16[2,8,32], index: 0, kind: input, shape index: {}]
  %s1 = inlined_call_operand.vmem [shape: bf16[2,8,32], index: 1, kind: input, shape index: {}]
  %s2 = inlined_call_operand.vmem [shape: bf16[2,8,32], index: 2, kind: input, shape index: {}]
  %s3 = inlined_call_operand.vmem [shape: bf16[4,32,8], index: 3, kind: input, shape index: {}]
  %s4 = inlined_call_operand.vmem [shape: f32[4,1,8], index: 4, kind: input, shape index: {}]
  %s5 = inlined_call_operand.vmem [shape: bf16[4,32,8], index: 5, kind: input, shape index: {}]
  %s6 = inlined_call_operand.vmem [shape: f32[4,1,8], index: 6, kind: input, shape index: {}]
  %s7 = inlined_call_operand.vmem [shape: bf16[4,32,8], index: 7, kind: input, shape index: {}]
  %s8 = inlined_call_operand.vmem [shape: f32[4,1,8], index: 8, kind: input, shape index: {}]
  %s9 = inlined_call_operand.vmem [shape: bf16[4,8,32], index: 9, kind: input, shape index: {}]
  %s10 = inlined_call_operand.vmem [shape: f32[1,32], index: 10, kind: input, shape index: {}]
  %s11 = inlined_call_operand.hbm [shape: f32[2,8,32], index: 11, kind: output, shape index: {0}]
  %s12 = inlined_call_operand.hbm [shape: f32[2,4,8,8], index: 12, kind: output, shape index: {1}]
  %13 = xla_tuple %s11, %s12
  %s14 = sld [smem:[#allocation0]]
  $region97: #{tpu_custom_call.1} parent=0
    _
  %s16 = ssub.s32 1, %s14
  %s17 = scalar_select 0, %s16, %s14
  $region1: #{tpu_custom_call.1} parent=0
    #allocation3 [shape = 'u8[8192]{0}', space=vmem, size = 0x2000, scoped, tag = 'output window, operand 0']
    #allocation4 [shape = 's32[2]{0}', space=sflag, size = 0x8, scoped, tag = 'scoped memory for tpu_custom_call.1']
    #allocation5 [shape = 'u8[8192]{0}', space=vmem, size = 0x2000, scoped, tag = 'output window, operand 1']
    #allocation6 [shape = 's32[2]{0}', space=sflag, size = 0x8, scoped, tag = 'scoped memory for tpu_custom_call.1']
    %18 = vsyncpa [#allocation4], 0
    %s19 = scalar_lea.sflag [#allocation4], 1
    %20 = vsyncpa %s19, 0
    %21 = vsyncpa [#allocation6], 0
    %s22 = scalar_lea.sflag [#allocation6], 1
    %23 = vsyncpa %s22, 0
    loop: start=0, step=1, limit=10
    $region2: #{tpu_custom_call.1} parent=1 // loop_pre_header
      _
    $region3: #{tpu_custom_call.1} parent=1 // loop_header
      %s25 = sphi 0, %s29
      %p26 = scmp.ge.s32.totalorder %s25, 10
      %s32 = sphi 0, %s44
      %s33 = sphi 0, %s40
      %s34 = sphi 0, %s32
      %s35 = sphi 0, %s33
      %s36 = sphi 0, %s34
      %s37 = sphi 0, %s35
      %s47 = sphi 0, %s49
      %s50 = sphi 0, %s47
      %s51 = sphi 0, %s50
      %s67 = sphi 0, %s51
      %s73 = sphi 0, %s75
      %s76 = sphi 0, %s73
      %s77 = sphi 0, %s76
      %s93 = sphi 0, %s77
      %s99 = sphi 0, %s101
      %s102 = sphi 0, %s99
      %s103 = sphi 0, %s102
      %s119 = sphi 0, %s103
      %s125 = sphi 0, %s127
      %s128 = sphi 0, %s125
      %s129 = sphi 0, %s128
      %s145 = sphi 0, %s129
      %s151 = sphi 0, %s153
      %s154 = sphi 0, %s151
      %s155 = sphi 0, %s154
      %s171 = sphi 0, %s155
      %s177 = sphi 0, %s179
      %s180 = sphi 0, %s177
      %s181 = sphi 0, %s180
      %s197 = sphi 0, %s181
      %s203 = sphi 0, %s205
      %s206 = sphi 0, %s203
      %s207 = sphi 0, %s206
      %s223 = sphi 0, %s207
      %s229 = sphi 0, %s231
      %s232 = sphi 0, %s229
      %s233 = sphi 0, %s232
      %s249 = sphi 0, %s233
      %s255 = sphi 0, %s257
      %s258 = sphi 0, %s255
      %s259 = sphi 0, %s258
      %s275 = sphi 0, %s259
      %s281 = sphi 0, %s283
      %s284 = sphi 0, %s281
      %s285 = sphi 0, %s284
      %s301 = sphi 0, %s285
      %s305 = sphi 0, %s305
      %s307 = sphi 0, %s305
      %s308 = sphi 0, %s307
      %s322 = sphi 0, %s308
      %s328 = sphi 0, %s330
      %s331 = sphi 0, %s328
      %s332 = sphi 0, %s331
      %s348 = sphi 0, %s332
      %s356 = sphi 0, %s358
      %s359 = sphi 0, %s356
      %s360 = sphi 0, %s359
      %s376 = sphi 0, %s360
    $region4: #{tpu_custom_call.1} parent=1 // loop_header_branch
      %28 = sbr.rel (%p26) target = $region8
    $region5: #{tpu_custom_call.1} parent=1 // loop_body
      %s30 = ssub.s32 %s25, 1
      %s31 = ssub.s32 %s25, 2
      %s38 = sadd.s32 1, %s33
      %p39 = scmp.ge.s32.totalorder %s38, 4
      %s40 = scalar_select %p39, 0, %s38
      %s41 = sadd.s32 1, %s32
      %s42 = scalar_select %p39, %s41, %s32
      %p43 = scmp.ge.s32.totalorder %s42, 2
      %s44 = scalar_select %p43, 0, %s42
      %s45 = ssub.s32 %s32, %s44
      %p46 = scmp.eq.s32.totalorder %s45, 0
      %s48 = sadd.s32 %s47, 1
      %s49 = scalar_select %p46, %s47, %s48
      %p52 = pneg %p46
      %p53 = scmp.eq.s32.totalorder %s25, 7
      %p54 = por %p52, %p53
      %p55 = scmp.ne.s32.totalorder %s47, %s50
      %p56 = scmp.eq.s32.totalorder %s25, 0
      %p57 = por %p55, %p56
      %p58 = scmp.ne.s32.totalorder %s47, %s50
      %p59 = scmp.eq.s32.totalorder %s30, 7
      %p60 = por %p58, %p59
      %p61 = scmp.ne.s32.totalorder %s50, %s51
      %p62 = scmp.eq.s32.totalorder %s30, 0
      %p63 = por %p61, %p62
      %p64 = scmp.ne.s32.totalorder %s50, %s51
      %p65 = scmp.eq.s32.totalorder %s31, 7
      %p66 = por %p64, %p65
      %p68 = scmp.ne.s32.totalorder %s51, %s67
      %p69 = scmp.eq.s32.totalorder %s31, 0
      %p70 = por %p68, %p69
      %s71 = ssub.s32 %s32, %s44
      %p72 = scmp.eq.s32.totalorder %s71, 0
      %s74 = sadd.s32 %s73, 1
      %s75 = scalar_select %p72, %s73, %s74
      %p78 = pneg %p72
      %p79 = scmp.eq.s32.totalorder %s25, 7
      %p80 = por %p78, %p79
      %p81 = scmp.ne.s32.totalorder %s73, %s76
      %p82 = scmp.eq.s32.totalorder %s25, 0
      %p83 = por %p81, %p82
      %p84 = scmp.ne.s32.totalorder %s73, %s76
      %p85 = scmp.eq.s32.totalorder %s30, 7
      %p86 = por %p84, %p85
      %p87 = scmp.ne.s32.totalorder %s76, %s77
      %p88 = scmp.eq.s32.totalorder %s30, 0
      %p89 = por %p87, %p88
      %p90 = scmp.ne.s32.totalorder %s76, %s77
      %p91 = scmp.eq.s32.totalorder %s31, 7
      %p92 = por %p90, %p91
      %p94 = scmp.ne.s32.totalorder %s77, %s93
      %p95 = scmp.eq.s32.totalorder %s31, 0
      %p96 = por %p94, %p95
      %s97 = ssub.s32 %s32, %s44
      %p98 = scmp.eq.s32.totalorder %s97, 0
      %s100 = sadd.s32 %s99, 1
      %s101 = scalar_select %p98, %s99, %s100
      %p104 = pneg %p98
      %p105 = scmp.eq.s32.totalorder %s25, 7
      %p106 = por %p104, %p105
      %p107 = scmp.ne.s32.totalorder %s99, %s102
      %p108 = scmp.eq.s32.totalorder %s25, 0
      %p109 = por %p107, %p108
      %p110 = scmp.ne.s32.totalorder %s99, %s102
      %p111 = scmp.eq.s32.totalorder %s30, 7
      %p112 = por %p110, %p111
      %p113 = scmp.ne.s32.totalorder %s102, %s103
      %p114 = scmp.eq.s32.totalorder %s30, 0
      %p115 = por %p113, %p114
      %p116 = scmp.ne.s32.totalorder %s102, %s103
      %p117 = scmp.eq.s32.totalorder %s31, 7
      %p118 = por %p116, %p117
      %p120 = scmp.ne.s32.totalorder %s103, %s119
      %p121 = scmp.eq.s32.totalorder %s31, 0
      %p122 = por %p120, %p121
      %s123 = ssub.s32 %s33, %s40
      %p124 = scmp.eq.s32.totalorder %s123, 0
      %s126 = sadd.s32 %s125, 1
      %s127 = scalar_select %p124, %s125, %s126
      %p130 = pneg %p124
      %p131 = scmp.eq.s32.totalorder %s25, 7
      %p132 = por %p130, %p131
      %p133 = scmp.ne.s32.totalorder %s125, %s128
      %p134 = scmp.eq.s32.totalorder %s25, 0
      %p135 = por %p133, %p134
      %p136 = scmp.ne.s32.totalorder %s125, %s128
      %p137 = scmp.eq.s32.totalorder %s30, 7
      %p138 = por %p136, %p137
      %p139 = scmp.ne.s32.totalorder %s128, %s129
      %p140 = scmp.eq.s32.totalorder %s30, 0
      %p141 = por %p139, %p140
      %p142 = scmp.ne.s32.totalorder %s128, %s129
      %p143 = scmp.eq.s32.totalorder %s31, 7
      %p144 = por %p142, %p143
      %p146 = scmp.ne.s32.totalorder %s129, %s145
      %p147 = scmp.eq.s32.totalorder %s31, 0
      %p148 = por %p146, %p147
      %s149 = ssub.s32 %s33, %s40
      %p150 = scmp.eq.s32.totalorder %s149, 0
      %s152 = sadd.s32 %s151, 1
      %s153 = scalar_select %p150, %s151, %s152
      %p156 = pneg %p150
      %p157 = scmp.eq.s32.totalorder %s25, 7
      %p158 = por %p156, %p157
      %p159 = scmp.ne.s32.totalorder %s151, %s154
      %p160 = scmp.eq.s32.totalorder %s25, 0
      %p161 = por %p159, %p160
      %p162 = scmp.ne.s32.totalorder %s151, %s154
      %p163 = scmp.eq.s32.totalorder %s30, 7
      %p164 = por %p162, %p163
      %p165 = scmp.ne.s32.totalorder %s154, %s155
      %p166 = scmp.eq.s32.totalorder %s30, 0
      %p167 = por %p165, %p166
      %p168 = scmp.ne.s32.totalorder %s154, %s155
      %p169 = scmp.eq.s32.totalorder %s31, 7
      %p170 = por %p168, %p169
      %p172 = scmp.ne.s32.totalorder %s155, %s171
      %p173 = scmp.eq.s32.totalorder %s31, 0
      %p174 = por %p172, %p173
      %s175 = ssub.s32 %s33, %s40
      %p176 = scmp.eq.s32.totalorder %s175, 0
      %s178 = sadd.s32 %s177, 1
      %s179 = scalar_select %p176, %s177, %s178
      %p182 = pneg %p176
      %p183 = scmp.eq.s32.totalorder %s25, 7
      %p184 = por %p182, %p183
      %p185 = scmp.ne.s32.totalorder %s177, %s180
      %p186 = scmp.eq.s32.totalorder %s25, 0
      %p187 = por %p185, %p186
      %p188 = scmp.ne.s32.totalorder %s177, %s180
      %p189 = scmp.eq.s32.totalorder %s30, 7
      %p190 = por %p188, %p189
      %p191 = scmp.ne.s32.totalorder %s180, %s181
      %p192 = scmp.eq.s32.totalorder %s30, 0
      %p193 = por %p191, %p192
      %p194 = scmp.ne.s32.totalorder %s180, %s181
      %p195 = scmp.eq.s32.totalorder %s31, 7
      %p196 = por %p194, %p195
      %p198 = scmp.ne.s32.totalorder %s181, %s197
      %p199 = scmp.eq.s32.totalorder %s31, 0
      %p200 = por %p198, %p199
      %s201 = ssub.s32 %s33, %s40
      %p202 = scmp.eq.s32.totalorder %s201, 0
      %s204 = sadd.s32 %s203, 1
      %s205 = scalar_select %p202, %s203, %s204
      %p208 = pneg %p202
      %p209 = scmp.eq.s32.totalorder %s25, 7
      %p210 = por %p208, %p209
      %p211 = scmp.ne.s32.totalorder %s203, %s206
      %p212 = scmp.eq.s32.totalorder %s25, 0
      %p213 = por %p211, %p212
      %p214 = scmp.ne.s32.totalorder %s203, %s206
      %p215 = scmp.eq.s32.totalorder %s30, 7
      %p216 = por %p214, %p215
      %p217 = scmp.ne.s32.totalorder %s206, %s207
      %p218 = scmp.eq.s32.totalorder %s30, 0
      %p219 = por %p217, %p218
      %p220 = scmp.ne.s32.totalorder %s206, %s207
      %p221 = scmp.eq.s32.totalorder %s31, 7
      %p222 = por %p220, %p221
      %p224 = scmp.ne.s32.totalorder %s207, %s223
      %p225 = scmp.eq.s32.totalorder %s31, 0
      %p226 = por %p224, %p225
      %s227 = ssub.s32 %s33, %s40
      %p228 = scmp.eq.s32.totalorder %s227, 0
      %s230 = sadd.s32 %s229, 1
      %s231 = scalar_select %p228, %s229, %s230
      %p234 = pneg %p228
      %p235 = scmp.eq.s32.totalorder %s25, 7
      %p236 = por %p234, %p235
      %p237 = scmp.ne.s32.totalorder %s229, %s232
      %p238 = scmp.eq.s32.totalorder %s25, 0
      %p239 = por %p237, %p238
      %p240 = scmp.ne.s32.totalorder %s229, %s232
      %p241 = scmp.eq.s32.totalorder %s30, 7
      %p242 = por %p240, %p241
      %p243 = scmp.ne.s32.totalorder %s232, %s233
      %p244 = scmp.eq.s32.totalorder %s30, 0
      %p245 = por %p243, %p244
      %p246 = scmp.ne.s32.totalorder %s232, %s233
      %p247 = scmp.eq.s32.totalorder %s31, 7
      %p248 = por %p246, %p247
      %p250 = scmp.ne.s32.totalorder %s233, %s249
      %p251 = scmp.eq.s32.totalorder %s31, 0
      %p252 = por %p250, %p251
      %s253 = ssub.s32 %s33, %s40
      %p254 = scmp.eq.s32.totalorder %s253, 0
      %s256 = sadd.s32 %s255, 1
      %s257 = scalar_select %p254, %s255, %s256
      %p260 = pneg %p254
      %p261 = scmp.eq.s32.totalorder %s25, 7
      %p262 = por %p260, %p261
      %p263 = scmp.ne.s32.totalorder %s255, %s258
      %p264 = scmp.eq.s32.totalorder %s25, 0
      %p265 = por %p263, %p264
      %p266 = scmp.ne.s32.totalorder %s255, %s258
      %p267 = scmp.eq.s32.totalorder %s30, 7
      %p268 = por %p266, %p267
      %p269 = scmp.ne.s32.totalorder %s258, %s259
      %p270 = scmp.eq.s32.totalorder %s30, 0
      %p271 = por %p269, %p270
      %p272 = scmp.ne.s32.totalorder %s258, %s259
      %p273 = scmp.eq.s32.totalorder %s31, 7
      %p274 = por %p272, %p273
      %p276 = scmp.ne.s32.totalorder %s259, %s275
      %p277 = scmp.eq.s32.totalorder %s31, 0
      %p278 = por %p276, %p277
      %s279 = ssub.s32 %s33, %s40
      %p280 = scmp.eq.s32.totalorder %s279, 0
      %s282 = sadd.s32 %s281, 1
      %s283 = scalar_select %p280, %s281, %s282
      %p286 = pneg %p280
      %p287 = scmp.eq.s32.totalorder %s25, 7
      %p288 = por %p286, %p287
      %p289 = scmp.ne.s32.totalorder %s281, %s284
      %p290 = scmp.eq.s32.totalorder %s25, 0
      %p291 = por %p289, %p290
      %p292 = scmp.ne.s32.totalorder %s281, %s284
      %p293 = scmp.eq.s32.totalorder %s30, 7
      %p294 = por %p292, %p293
      %p295 = scmp.ne.s32.totalorder %s284, %s285
      %p296 = scmp.eq.s32.totalorder %s30, 0
      %p297 = por %p295, %p296
      %p298 = scmp.ne.s32.totalorder %s284, %s285
      %p299 = scmp.eq.s32.totalorder %s31, 7
      %p300 = por %p298, %p299
      %p302 = scmp.ne.s32.totalorder %s285, %s301
      %p303 = scmp.eq.s32.totalorder %s31, 0
      %p304 = por %p302, %p303
      %s306 = sadd.s32 %s305, 1
      %p309 = scmp.eq.s32.totalorder %s25, 7
      %p310 = scmp.ne.s32.totalorder %s305, %s307
      %p311 = scmp.eq.s32.totalorder %s25, 0
      %p312 = por %p310, %p311
      %p313 = scmp.ne.s32.totalorder %s305, %s307
      %p314 = scmp.eq.s32.totalorder %s30, 7
      %p315 = por %p313, %p314
      %p316 = scmp.ne.s32.totalorder %s307, %s308
      %p317 = scmp.eq.s32.totalorder %s30, 0
      %p318 = por %p316, %p317
      %p319 = scmp.ne.s32.totalorder %s307, %s308
      %p320 = scmp.eq.s32.totalorder %s31, 7
      %p321 = por %p319, %p320
      %p323 = scmp.ne.s32.totalorder %s308, %s322
      %p324 = scmp.eq.s32.totalorder %s31, 0
      %p325 = por %p323, %p324
      %s326 = ssub.s32 %s32, %s44
      %p327 = scmp.eq.s32.totalorder %s326, 0
      %s329 = sadd.s32 %s328, 1
      %s330 = scalar_select %p327, %s328, %s329
      %p333 = pneg %p327
      %p334 = scmp.eq.s32.totalorder %s25, 7
      %p335 = por %p333, %p334
      %p336 = scmp.ne.s32.totalorder %s328, %s331
      %p337 = scmp.eq.s32.totalorder %s25, 0
      %p338 = por %p336, %p337
      %p339 = scmp.ne.s32.totalorder %s328, %s331
      %p340 = scmp.eq.s32.totalorder %s30, 7
      %p341 = por %p339, %p340
      %p342 = scmp.ne.s32.totalorder %s331, %s332
      %p343 = scmp.eq.s32.totalorder %s30, 0
      %p344 = por %p342, %p343
      %p345 = scmp.ne.s32.totalorder %s331, %s332
      %p346 = scmp.eq.s32.totalorder %s31, 7
      %p347 = por %p345, %p346
      %p349 = scmp.ne.s32.totalorder %s332, %s348
      %p350 = scmp.eq.s32.totalorder %s31, 0
      %p351 = por %p349, %p350
      %s352 = ssub.s32 %s32, %s44
      %s353 = ssub.s32 %s33, %s40
      %s354 = sor.u32 %s352, %s353
      %p355 = scmp.eq.s32.totalorder %s354, 0
      %s357 = sadd.s32 %s356, 1
      %s358 = scalar_select %p355, %s356, %s357
      %p361 = pneg %p355
      %p362 = scmp.eq.s32.totalorder %s25, 7
      %p363 = por %p361, %p362
      %p364 = scmp.ne.s32.totalorder %s356, %s359
      %p365 = scmp.eq.s32.totalorder %s25, 0
      %p366 = por %p364, %p365
      %p367 = scmp.ne.s32.totalorder %s356, %s359
      %p368 = scmp.eq.s32.totalorder %s30, 7
      %p369 = por %p367, %p368
      %p370 = scmp.ne.s32.totalorder %s359, %s360
      %p371 = scmp.eq.s32.totalorder %s30, 0
      %p372 = por %p370, %p371
      %p373 = scmp.ne.s32.totalorder %s359, %s360
      %p374 = scmp.eq.s32.totalorder %s31, 7
      %p375 = por %p373, %p374
      %p377 = scmp.ne.s32.totalorder %s360, %s376
      %p378 = scmp.eq.s32.totalorder %s31, 0
      %p379 = por %p377, %p378
      %p380 = scmp.le.s32.totalorder 1, %s25
      %p381 = scmp.lt.s32.totalorder %s25, 9
      %p382 = pnand %p380, %p381
      %p383 = pneg %p382
      // Predicated region
      $region9: #{tpu_custom_call.1} parent=5 // pred_check
        _
      $region10: #{tpu_custom_call.1} parent=5 // pred_check_branch
        %385 = sbr.rel (%p382) target = $region12
      $region11: #{tpu_custom_call.1} parent=5 // pred_region
        %s386 = ssub.s32 %s25, 1
        // Predicated region
        $region13: #{tpu_custom_call.1} parent=11 // pred_check
          %p387 = pneg %p318
        $region14: #{tpu_custom_call.1} parent=11 // pred_check_branch
          %389 = sbr.rel (%p387) target = $region16
        $region15: #{tpu_custom_call.1} parent=11 // pred_region
          _
        $region16: #{tpu_custom_call.1} parent=11 // pred_fallthru
          _
      $region12: #{tpu_custom_call.1} parent=5 // pred_fallthru
        _
      %p390 = scmp.lt.s32.totalorder %s25, 8
      // Predicated region
      $region17: #{tpu_custom_call.1} parent=5 // pred_check
        %p391 = pneg %p390
      $region18: #{tpu_custom_call.1} parent=5 // pred_check_branch
        %393 = sbr.rel (%p391) target = $region20
      $region19: #{tpu_custom_call.1} parent=5 // pred_region
        // Predicated region
        $region21: #{tpu_custom_call.1} parent=19 // pred_check
          %p394 = pneg %p57
        $region22: #{tpu_custom_call.1} parent=19 // pred_check_branch
          %396 = sbr.rel (%p394) target = $region24
        $region23: #{tpu_custom_call.1} parent=19 // pred_region
          %p397 = scmp.lt.s32.totalorder %s32, 1
          %s398 = scalar_select %p397, %s32, 1
          %s399 = smul.addr %s398, 4
          %s400 = scalar_lea.vmem %s0, %s399
        $region24: #{tpu_custom_call.1} parent=19 // pred_fallthru
          _
        // Predicated region
        $region25: #{tpu_custom_call.1} parent=19 // pred_check
          %p401 = pneg %p83
        $region26: #{tpu_custom_call.1} parent=19 // pred_check_branch
          %403 = sbr.rel (%p401) target = $region28
        $region27: #{tpu_custom_call.1} parent=19 // pred_region
          %p404 = scmp.lt.s32.totalorder %s32, 1
          %s405 = scalar_select %p404, %s32, 1
          %s406 = smul.addr %s405, 4
          %s407 = scalar_lea.vmem %s1, %s406
        $region28: #{tpu_custom_call.1} parent=19 // pred_fallthru
          _
        // Predicated region
        $region29: #{tpu_custom_call.1} parent=19 // pred_check
          %p408 = pneg %p109
        $region30: #{tpu_custom_call.1} parent=19 // pred_check_branch
          %410 = sbr.rel (%p408) target = $region32
        $region31: #{tpu_custom_call.1} parent=19 // pred_region
          %p411 = scmp.lt.s32.totalorder %s32, 1
          %s412 = scalar_select %p411, %s32, 1
          %s413 = smul.addr %s412, 4
          %s414 = scalar_lea.vmem %s2, %s413
        $region32: #{tpu_custom_call.1} parent=19 // pred_fallthru
          _
        // Predicated region
        $region33: #{tpu_custom_call.1} parent=19 // pred_check
          %p415 = pneg %p135
        $region34: #{tpu_custom_call.1} parent=19 // pred_check_branch
          %417 = sbr.rel (%p415) target = $region36
        $region35: #{tpu_custom_call.1} parent=19 // pred_region
          %p418 = scmp.lt.s32.totalorder %s33, 3
          %s419 = scalar_select %p418, %s33, 3
          %s420 = smul.addr %s419, 4
          %s421 = smul.addr %s420, 4
          %s422 = scalar_lea.vmem %s3, %s421
        $region36: #{tpu_custom_call.1} parent=19 // pred_fallthru
          _
        // Predicated region
        $region37: #{tpu_custom_call.1} parent=19 // pred_check
          %p423 = pneg %p161
        $region38: #{tpu_custom_call.1} parent=19 // pred_check_branch
          %425 = sbr.rel (%p423) target = $region40
        $region39: #{tpu_custom_call.1} parent=19 // pred_region
          %p426 = scmp.lt.s32.totalorder %s33, 3
          %s427 = scalar_select %p426, %s33, 3
          %s428 = scalar_lea.vmem %s4, %s427
        $region40: #{tpu_custom_call.1} parent=19 // pred_fallthru
          _
        // Predicated region
        $region41: #{tpu_custom_call.1} parent=19 // pred_check
          %p429 = pneg %p187
        $region42: #{tpu_custom_call.1} parent=19 // pred_check_branch
          %431 = sbr.rel (%p429) target = $region44
        $region43: #{tpu_custom_call.1} parent=19 // pred_region
          %p432 = scmp.lt.s32.totalorder %s33, 3
          %s433 = scalar_select %p432, %s33, 3
          %s434 = smul.addr %s433, 4
          %s435 = smul.addr %s434, 4
          %s436 = scalar_lea.vmem %s5, %s435
        $region44: #{tpu_custom_call.1} parent=19 // pred_fallthru
          _
        // Predicated region
        $region45: #{tpu_custom_call.1} parent=19 // pred_check
          %p437 = pneg %p213
        $region46: #{tpu_custom_call.1} parent=19 // pred_check_branch
          %439 = sbr.rel (%p437) target = $region48
        $region47: #{tpu_custom_call.1} parent=19 // pred_region
          %p440 = scmp.lt.s32.totalorder %s33, 3
          %s441 = scalar_select %p440, %s33, 3
          %s442 = scalar_lea.vmem %s6, %s441
        $region48: #{tpu_custom_call.1} parent=19 // pred_fallthru
          _
        // Predicated region
        $region49: #{tpu_custom_call.1} parent=19 // pred_check
          %p443 = pneg %p239
        $region50: #{tpu_custom_call.1} parent=19 // pred_check_branch
          %445 = sbr.rel (%p443) target = $region52
        $region51: #{tpu_custom_call.1} parent=19 // pred_region
          %p446 = scmp.lt.s32.totalorder %s33, 3
          %s447 = scalar_select %p446, %s33, 3
          %s448 = smul.addr %s447, 4
          %s449 = smul.addr %s448, 4
          %s450 = scalar_lea.vmem %s7, %s449
        $region52: #{tpu_custom_call.1} parent=19 // pred_fallthru
          _
        // Predicated region
        $region53: #{tpu_custom_call.1} parent=19 // pred_check
          %p451 = pneg %p265
        $region54: #{tpu_custom_call.1} parent=19 // pred_check_branch
          %453 = sbr.rel (%p451) target = $region56
        $region55: #{tpu_custom_call.1} parent=19 // pred_region
          %p454 = scmp.lt.s32.totalorder %s33, 3
          %s455 = scalar_select %p454, %s33, 3
          %s456 = scalar_lea.vmem %s8, %s455
        $region56: #{tpu_custom_call.1} parent=19 // pred_fallthru
          _
        // Predicated region
        $region57: #{tpu_custom_call.1} parent=19 // pred_check
          %p457 = pneg %p291
        $region58: #{tpu_custom_call.1} parent=19 // pred_check_branch
          %459 = sbr.rel (%p457) target = $region60
        $region59: #{tpu_custom_call.1} parent=19 // pred_region
          %p460 = scmp.lt.s32.totalorder %s33, 3
          %s461 = scalar_select %p460, %s33, 3
          %s462 = smul.addr %s461, 4
          %s463 = scalar_lea.vmem %s9, %s462
        $region60: #{tpu_custom_call.1} parent=19 // pred_fallthru
          _
      $region20: #{tpu_custom_call.1} parent=5 // pred_fallthru
        _
      %p464 = scmp.le.s32.totalorder 1, %s25
      %p465 = scmp.lt.s32.totalorder %s25, 9
      %p466 = pnand %p464, %p465
      %p467 = pneg %p466
      // Predicated region
      $region61: #{tpu_custom_call.1} parent=5 // pred_check
        _
      $region62: #{tpu_custom_call.1} parent=5 // pred_check_branch
        %469 = sbr.rel (%p466) target = $region64
      $region63: #{tpu_custom_call.1} parent=5 // pred_region
        %s470 = ssub.s32 %s25, 1
        %p471 = scmp.lt.s32.totalorder %s34, 1
        %s472 = scalar_select %p471, %s34, 1
        %s473 = smul.addr %s472, 4
        %s474 = scalar_lea.vmem %s0, %s473
        %p475 = pneg %p63
        %p476 = pneg %p60
        %p477 = scmp.lt.s32.totalorder %s34, 1
        %s478 = scalar_select %p477, %s34, 1
        %s479 = smul.addr %s478, 4
        %s480 = scalar_lea.vmem %s1, %s479
        %p481 = pneg %p89
        %p482 = pneg %p86
        %p483 = scmp.lt.s32.totalorder %s34, 1
        %s484 = scalar_select %p483, %s34, 1
        %s485 = smul.addr %s484, 4
        %s486 = scalar_lea.vmem %s2, %s485
        %p487 = pneg %p115
        %p488 = pneg %p112
        %p489 = scmp.lt.s32.totalorder %s35, 3
        %s490 = scalar_select %p489, %s35, 3
        %s491 = smul.addr %s490, 4
        %s492 = smul.addr %s491, 4
        %s493 = scalar_lea.vmem %s3, %s492
        %p494 = pneg %p141
        %p495 = pneg %p138
        %p496 = scmp.lt.s32.totalorder %s35, 3
        %s497 = scalar_select %p496, %s35, 3
        %s498 = scalar_lea.vmem %s4, %s497
        %p499 = pneg %p167
        %p500 = pneg %p164
        %p501 = scmp.lt.s32.totalorder %s35, 3
        %s502 = scalar_select %p501, %s35, 3
        %s503 = smul.addr %s502, 4
        %s504 = smul.addr %s503, 4
        %s505 = scalar_lea.vmem %s5, %s504
        %p506 = pneg %p193
        %p507 = pneg %p190
        %p508 = scmp.lt.s32.totalorder %s35, 3
        %s509 = scalar_select %p508, %s35, 3
        %s510 = scalar_lea.vmem %s6, %s509
        %p511 = pneg %p219
        %p512 = pneg %p216
        %p513 = scmp.lt.s32.totalorder %s35, 3
        %s514 = scalar_select %p513, %s35, 3
        %s515 = smul.addr %s514, 4
        %s516 = smul.addr %s515, 4
        %s517 = scalar_lea.vmem %s7, %s516
        %p518 = pneg %p245
        %p519 = pneg %p242
        %p520 = scmp.lt.s32.totalorder %s35, 3
        %s521 = scalar_select %p520, %s35, 3
        %s522 = scalar_lea.vmem %s8, %s521
        %p523 = pneg %p271
        %p524 = pneg %p268
        %p525 = scmp.lt.s32.totalorder %s35, 3
        %s526 = scalar_select %p525, %s35, 3
        %s527 = smul.addr %s526, 4
        %s528 = scalar_lea.vmem %s9, %s527
        %p529 = pneg %p297
        %p530 = pneg %p294
        %p531 = pneg %p318
        %p532 = pneg %p315
        %p533 = pneg %p344
        %p534 = pneg %p341
        %s535 = sand.u32 %s331, 1
        %s536 = scalar_lea.sflag [#allocation4], %s535
        %s537 = sand.u32 %s331, 1
        %s538 = smul.addr %s537, 8
        %s539 = scalar_lea.vmem [#allocation3], %s538
        %p540 = pneg %p372
        %p541 = pneg %p369
        %s542 = sand.u32 %s359, 1
        %s543 = scalar_lea.sflag [#allocation6], %s542
        %s544 = sand.u32 %s359, 1
        %s545 = smul.addr %s544, 8
        %s546 = scalar_lea.vmem [#allocation5], %s545
        %p547 = scmp.lt.s32.totalorder %s34, 1
        %s548 = scalar_select %p547, %s34, 1
        %s549 = smul.addr %s548, 4
        %s550 = scalar_lea.vmem %s0, %s549
        %p551 = scmp.lt.s32.totalorder %s34, 1
        %s552 = scalar_select %p551, %s34, 1
        %s553 = smul.addr %s552, 4
        %s554 = scalar_lea.vmem %s1, %s553
        %p555 = scmp.lt.s32.totalorder %s34, 1
        %s556 = scalar_select %p555, %s34, 1
        %s557 = smul.addr %s556, 4
        %s558 = scalar_lea.vmem %s2, %s557
        %p559 = scmp.lt.s32.totalorder %s35, 3
        %s560 = scalar_select %p559, %s35, 3
        %s561 = smul.addr %s560, 4
        %s562 = smul.addr %s561, 4
        %s563 = scalar_lea.vmem %s3, %s562
        %p564 = scmp.lt.s32.totalorder %s35, 3
        %s565 = scalar_select %p564, %s35, 3
        %s566 = scalar_lea.vmem %s4, %s565
        %p567 = scmp.lt.s32.totalorder %s35, 3
        %s568 = scalar_select %p567, %s35, 3
        %s569 = smul.addr %s568, 4
        %s570 = smul.addr %s569, 4
        %s571 = scalar_lea.vmem %s5, %s570
        %p572 = scmp.lt.s32.totalorder %s35, 3
        %s573 = scalar_select %p572, %s35, 3
        %s574 = scalar_lea.vmem %s6, %s573
        %p575 = scmp.lt.s32.totalorder %s35, 3
        %s576 = scalar_select %p575, %s35, 3
        %s577 = smul.addr %s576, 4
        %s578 = smul.addr %s577, 4
        %s579 = scalar_lea.vmem %s7, %s578
        %p580 = scmp.lt.s32.totalorder %s35, 3
        %s581 = scalar_select %p580, %s35, 3
        %s582 = scalar_lea.vmem %s8, %s581
        %p583 = scmp.lt.s32.totalorder %s35, 3
        %s584 = scalar_select %p583, %s35, 3
        %s585 = smul.addr %s584, 4
        %s586 = scalar_lea.vmem %s9, %s585
        %v588 = vld [vmem:[%s550] sm:$0xf]
        %v589 = vld [vmem:[%s554] sm:$0xf]
        %v590 = vld [vmem:[%s558] sm:$0xf]
        %v591 = vld [vmem:[%s563] sm:$0xf]
        %v592 = vld [vmem:[%s563 + $0x4] sm:$0xf]
        %v593 = vld [vmem:[%s563 + $0x8] sm:$0xf]
        %v594 = vld [vmem:[%s563 + $0xc] sm:$0xf]
        %v595 = vld [vmem:[%s566] sm:$0x1]
        %v597 = vperm.slane %v595, 0
        %v603 = vunpack.c.l.b16 %v591
        %v604 = vunpack.c.l.b16 %v592
        %v605 = vunpack.c.l.b16 %v593
        %v606 = vunpack.c.l.b16 %v594
        %v607 = vpack.c.b16 %v604, %v603
        %v608 = vpack.c.b16 %v606, %v605
        %vm611 = vcmask 261120
        %v613 = vsel %vm611, %v588, 0
        %615 = vmatpush.bf16.msra.mxu0 0
        %616 = vmatpush.bf16.msra.mxu0 0
        %617 = vmatpush.bf16.msra.mxu0 0
        %618 = vmatpush.bf16.msra.mxu0 0
        %619 = vmatpush.bf16.msra.mxu0 0
        %620 = vmatpush.bf16.msra.mxu0 0
        %621 = vmatpush.bf16.msra.mxu0 %v608
        %622 = vmatpush.bf16.msra.mxu0 %v607
        %623 = vmatmul.bf16.gmra.mxu0 %v613
        %v624 = vpop.f32.mrf.mxu0
        %v625 = vadd.f32 %v597, %v624
        %v626 = vpop.f32.mrf.mxu0
        %627 = vdwg.mxu0
        %v628 = vld [vmem:[%s571] sm:$0xf]
        %v629 = vld [vmem:[%s571 + $0x4] sm:$0xf]
        %v630 = vld [vmem:[%s571 + $0x8] sm:$0xf]
        %v631 = vld [vmem:[%s571 + $0xc] sm:$0xf]
        %v632 = vld [vmem:[%s574] sm:$0x1]
        %v634 = vperm.slane %v632, 0
        %v640 = vunpack.c.l.b16 %v628
        %v641 = vunpack.c.l.b16 %v629
        %v642 = vunpack.c.l.b16 %v630
        %v643 = vunpack.c.l.b16 %v631
        %v644 = vpack.c.b16 %v641, %v640
        %v645 = vpack.c.b16 %v643, %v642
        %v649 = vsel %vm611, %v589, 0
        %651 = vmatpush.bf16.msra.mxu0 0
        %652 = vmatpush.bf16.msra.mxu0 0
        %653 = vmatpush.bf16.msra.mxu0 0
        %654 = vmatpush.bf16.msra.mxu0 0
        %655 = vmatpush.bf16.msra.mxu0 0
        %656 = vmatpush.bf16.msra.mxu0 0
        %657 = vmatpush.bf16.msra.mxu0 %v645
        %658 = vmatpush.bf16.msra.mxu0 %v644
        %659 = vmatmul.bf16.gmra.mxu0 %v649
        %v660 = vpop.f32.mrf.mxu0
        %v661 = vadd.f32 %v634, %v660
        %v662 = vpop.f32.mrf.mxu0
        %663 = vdwg.mxu0
        %v664 = vld [vmem:[%s579] sm:$0xf]
        %v665 = vld [vmem:[%s579 + $0x4] sm:$0xf]
        %v666 = vld [vmem:[%s579 + $0x8] sm:$0xf]
        %v667 = vld [vmem:[%s579 + $0xc] sm:$0xf]
        %v668 = vld [vmem:[%s582] sm:$0x1]
        %v670 = vperm.slane %v668, 0
        %v676 = vunpack.c.l.b16 %v664
        %v677 = vunpack.c.l.b16 %v665
        %v678 = vunpack.c.l.b16 %v666
        %v679 = vunpack.c.l.b16 %v667
        %v680 = vpack.c.b16 %v677, %v676
        %v681 = vpack.c.b16 %v679, %v678
        %v685 = vsel %vm611, %v590, 0
        %687 = vmatpush.bf16.msra.mxu0 0
        %688 = vmatpush.bf16.msra.mxu0 0
        %689 = vmatpush.bf16.msra.mxu0 0
        %690 = vmatpush.bf16.msra.mxu0 0
        %691 = vmatpush.bf16.msra.mxu0 0
        %692 = vmatpush.bf16.msra.mxu0 0
        %693 = vmatpush.bf16.msra.mxu0 %v681
        %694 = vmatpush.bf16.msra.mxu0 %v680
        %695 = vmatmul.bf16.gmra.mxu0 %v685
        %v696 = vpop.f32.mrf.mxu0
        %v697 = vadd.f32 %v670, %v696
        %v698 = vpop.f32.mrf.mxu0
        %699 = vdwg.mxu0
        %v700 = vmul.f32 %v625, 0.35355338
        %v701 = vpack.c.bf16 %v700, %v700
        %v702 = vpack.c.bf16 %v661, %v661
        %vm703 = vcmask 64512
        %v705 = vsel %vm703, %v701, 0
        %v708 = vsel %vm703, %v702, 0
        %710 = vmatpush.bf16.xpose.msra.mxu0 0
        %711 = vmatpush.bf16.xpose.msra.mxu0 0
        %712 = vmatpush.bf16.xpose.msra.mxu0 0
        %713 = vmatpush.bf16.xpose.msra.mxu0 0
        %714 = vmatpush.bf16.xpose.msra.mxu0 0
        %715 = vmatpush.bf16.xpose.msra.mxu0 0
        %716 = vmatpush.bf16.xpose.msra.mxu0 0
        %717 = vmatpush.bf16.xpose.msra.mxu0 %v708
        %718 = vmatmul.bf16.gmra.mxu0 %v705
        %v719 = vpop.f32.mrf.mxu0
        %v720 = vadd.f32 0.0, %v719
        %v721 = vpop.f32.mrf.mxu0
        %722 = vdwg.mxu0
        %v723 = vsel %vm703, %v720, -inf
        %724 = vmax.xlane.f32.xlu0 %v723
        %v725 = vpop.xlane.xlu0 %724
        %v726 = vsub.f32 %v720, %v725
        %v727 = vmul.f32 %v726, 1.442695
        %v728 = vpow.pop %v727
        %v729 = vsel %vm703, %v728, 0.0
        %730 = vadd.xlane.f32.xlu0 %v729
        %v731 = vpop.xlane.xlu0 %730
        %v732 = vrcp.pop %v731
        %v733 = vmul.f32 %v728, %v732
        %v734 = vpack.c.bf16 %v733, %v733
        %v735 = vpack.c.bf16 %v697, %v697
        %v737 = vsel %vm703, %v734, 0
        %vm739 = vcmask 1043456
        %v741 = vsel %vm739, %v735, 0
        %743 = vmatpush.bf16.msra.mxu0 0
        %744 = vmatpush.bf16.msra.mxu0 0
        %745 = vmatpush.bf16.msra.mxu0 0
        %746 = vmatpush.bf16.msra.mxu0 0
        %747 = vmatpush.bf16.msra.mxu0 0
        %748 = vmatpush.bf16.msra.mxu0 0
        %749 = vmatpush.bf16.msra.mxu0 0
        %750 = vmatpush.bf16.msra.mxu0 %v741
        %751 = vmatmul.bf16.gmra.mxu0 %v737
        %v752 = vpop.f32.mrf.mxu0
        %v753 = vadd.f32 0.0, %v752
        %v754 = vpop.f32.mrf.mxu0
        %755 = vdwg.mxu0
        %v756 = vpack.c.bf16 %v753, %v753
        %v757 = vld [vmem:[%s586] sm:$0xf]
        %v759 = vsel %vm703, %v756, 0
        %v762 = vsel %vm739, %v757, 0
        %764 = vmatpush.bf16.msra.mxu0 0
        %765 = vmatpush.bf16.msra.mxu0 0
        %766 = vmatpush.bf16.msra.mxu0 0
        %767 = vmatpush.bf16.msra.mxu0 0
        %768 = vmatpush.bf16.msra.mxu0 0
        %769 = vmatpush.bf16.msra.mxu0 0
        %770 = vmatpush.bf16.msra.mxu0 0
        %771 = vmatpush.bf16.msra.mxu0 %v762
        %772 = vmatmul.bf16.gmra.mxu0 %v759
        %v773 = vpop.f32.mrf.mxu0
        %v774 = vadd.f32 0.0, %v773
        %v775 = vpop.f32.mrf.mxu0
        %776 = vdwg.mxu0
        %p777 = scmp.eq.s32.totalorder %s35, 0
        // Predicated region
        $region65: #{tpu_custom_call.1} parent=63 // pred_check
          %p778 = pneg %p777
        $region66: #{tpu_custom_call.1} parent=63 // pred_check_branch
          %780 = sbr.rel (%p778) target = $region68
        $region67: #{tpu_custom_call.1} parent=63 // pred_region
          %v781 = vld [vmem:[%s10] sm:$0x1]
          %v783 = vperm.slane %v781, 0
          %v785 = vadd.f32 %v774, %v783
          %786 = vst.msk [vmem:[#allocation2] sm:$0xff] %vm611, %v785
        $region68: #{tpu_custom_call.1} parent=63 // pred_fallthru
          _
        %p787 = scmp.ne.s32.totalorder %s35, 0
        // Predicated region
        $region69: #{tpu_custom_call.1} parent=63 // pred_check
          %p788 = pneg %p787
        $region70: #{tpu_custom_call.1} parent=63 // pred_check_branch
          %790 = sbr.rel (%p788) target = $region72
        $region71: #{tpu_custom_call.1} parent=63 // pred_region
          %v791 = vld [vmem:[#allocation2] sm:$0xff]
          %v792 = vadd.f32 %v791, %v774
          %793 = vst.msk [vmem:[#allocation2] sm:$0xff] %vm611, %v792
        $region72: #{tpu_custom_call.1} parent=63 // pred_fallthru
          _
        %p794 = scmp.eq.s32.totalorder %s35, 3
        // Predicated region
        $region73: #{tpu_custom_call.1} parent=63 // pred_check
          %p795 = pneg %p794
        $region74: #{tpu_custom_call.1} parent=63 // pred_check_branch
          %797 = sbr.rel (%p795) target = $region76
        $region75: #{tpu_custom_call.1} parent=63 // pred_region
          %v798 = vld [vmem:[#allocation2] sm:$0xff]
          %799 = vst.msk [vmem:[%s539] sm:$0xff] %vm611, %v798
        $region76: #{tpu_custom_call.1} parent=63 // pred_fallthru
          _
        %800 = vst.msk [vmem:[%s546] sm:$0xff] %vm703, %v733
        %s801 = sand.u32 %s331, 1
        %s802 = scalar_lea.sflag [#allocation4], %s801
        %s803 = sand.u32 %s331, 1
        %s804 = smul.addr %s803, 8
        %s805 = scalar_lea.vmem [#allocation3], %s804
        %s806 = sand.u32 %s359, 1
        %s807 = scalar_lea.sflag [#allocation6], %s806
        %s808 = sand.u32 %s359, 1
        %s809 = smul.addr %s808, 8
        %s810 = scalar_lea.vmem [#allocation5], %s809
        // Predicated region
        $region77: #{tpu_custom_call.1} parent=63 // pred_check
          %p811 = pneg %p341
        $region78: #{tpu_custom_call.1} parent=63 // pred_check_branch
          %813 = sbr.rel (%p811) target = $region80
        $region79: #{tpu_custom_call.1} parent=63 // pred_region
          %815 = vsyncadd %s802, 0
          %s816 = smul.addr %s34, 8
          %s817 = scalar_lea.hbm %s11, %s816
          %s819 = sshll.u32 %s805, 4
          %s820 = int_to_ptr.vmem [resolvable:$true] %s819
          %s821 = sshll.u32 %s817, 4
          %s822 = int_to_ptr.hbm [resolvable:$true] %s821
          %824 = dma.vmem_to_hbm [thread:$0]  %s820, 128, %s822, %s802
        $region80: #{tpu_custom_call.1} parent=63 // pred_fallthru
          _
        // Predicated region
        $region81: #{tpu_custom_call.1} parent=63 // pred_check
          %p825 = pneg %p369
        $region82: #{tpu_custom_call.1} parent=63 // pred_check_branch
          %827 = sbr.rel (%p825) target = $region84
        $region83: #{tpu_custom_call.1} parent=63 // pred_region
          %829 = vsyncadd %s807, 0
          %s830 = smul.addr %s34, 4
          %s831 = sadd.s32 %s35, %s830
          %s832 = smul.addr %s831, 8
          %s833 = scalar_lea.hbm %s12, %s832
          %s835 = sshll.u32 %s810, 4
          %s836 = int_to_ptr.vmem [resolvable:$true] %s835
          %s837 = sshll.u32 %s833, 4
          %s838 = int_to_ptr.hbm [resolvable:$true] %s837
          %840 = dma.vmem_to_hbm [thread:$0]  %s836, 128, %s838, %s807
        $region84: #{tpu_custom_call.1} parent=63 // pred_fallthru
          _
      $region64: #{tpu_custom_call.1} parent=5 // pred_fallthru
        _
      %p841 = scmp.le.s32.totalorder 2, %s25
      // Predicated region
      $region85: #{tpu_custom_call.1} parent=5 // pred_check
        %p842 = pneg %p841
      $region86: #{tpu_custom_call.1} parent=5 // pred_check_branch
        %844 = sbr.rel (%p842) target = $region88
      $region87: #{tpu_custom_call.1} parent=5 // pred_region
        %s845 = ssub.s32 %s25, 2
        // Predicated region
        $region89: #{tpu_custom_call.1} parent=87 // pred_check
          %p846 = pneg %p347
        $region90: #{tpu_custom_call.1} parent=87 // pred_check_branch
          %848 = sbr.rel (%p846) target = $region92
        $region91: #{tpu_custom_call.1} parent=87 // pred_region
          %s849 = sand.u32 %s332, 1
          %s850 = scalar_lea.sflag [#allocation4], %s849
          %s851 = sand.u32 %s332, 1
          %s852 = smul.addr %s851, 8
          %s853 = scalar_lea.vmem [#allocation3], %s852
          %855 = dma.done %s850, 128
        $region92: #{tpu_custom_call.1} parent=87 // pred_fallthru
          _
        // Predicated region
        $region93: #{tpu_custom_call.1} parent=87 // pred_check
          %p856 = pneg %p375
        $region94: #{tpu_custom_call.1} parent=87 // pred_check_branch
          %858 = sbr.rel (%p856) target = $region96
        $region95: #{tpu_custom_call.1} parent=87 // pred_region
          %s859 = sand.u32 %s360, 1
          %s860 = scalar_lea.sflag [#allocation6], %s859
          %s861 = sand.u32 %s360, 1
          %s862 = smul.addr %s861, 8
          %s863 = scalar_lea.vmem [#allocation5], %s862
          %865 = dma.done %s860, 128
        $region96: #{tpu_custom_call.1} parent=87 // pred_fallthru
          _
      $region88: #{tpu_custom_call.1} parent=5 // pred_fallthru
        _
    $region6: #{tpu_custom_call.1} parent=1 // loop_footer
      %s29 = sadd.s32 1, %s25
    $region7: #{tpu_custom_call.1} parent=1 // loop_footer_branch
      %24 = sbr.rel target = $region3
    $region8: #{tpu_custom_call.1} parent=1 // loop_exit
      _
    %866 = vsyncpa [#allocation4], 1
    %s867 = scalar_lea.sflag [#allocation4], 1
    %868 = vsyncpa %s867, 1
    %869 = vsyncpa [#allocation6], 1
    %s870 = scalar_lea.sflag [#allocation6], 1
    %871 = vsyncpa %s870, 1

</llo_original>
